<compile_context>
chip_gen: v5e
topology: v5e:2x2
jax: 0.10.0
libtpu: 0.0.40
codegen_flags: <defaults>
</compile_context>

<pallas_src>
import math
from functools import partial

import jax
import jax.numpy as jnp
from jax import lax
from jax.experimental import pallas as pl
from jax.experimental.pallas import tpu as pltpu


# ---------------- packed-parameter slab layout (lane width = 128) ----------------
H_P = 128        # padded hidden dim (n1 = 32 -> 128 lanes)
OUT_SUB = 8      # sublane-aligned row block holding the transposed output head
LANES = 128
_B_ROWS = 8      # sublane-aligned rows reserved per bias block


def _round_up(x, m):
    return ((x + m - 1) // m) * m


def _layout(in_dim):
    """Row offsets of each parameter block inside the packed (rows, 128) f32 slab."""
    in_sub = _round_up(in_dim, 8)            # sublane-aligned input-feature rows
    w1 = 0                                   # (in_sub, 128)   layer1, (in, out)
    w2 = w1 + in_sub                         # (128, 128)      layer2, (in, out)
    w3t = w2 + H_P                           # (8, 128)        layer3, (out, in)
    b1 = w3t + OUT_SUB                       # bias1 in row 0
    b2 = b1 + _B_ROWS                        # bias2 in row 0
    b3t = b2 + _B_ROWS                       # bias3 in column 0, rows 0..n_out-1
    rows = b3t + _B_ROWS
    return dict(in_sub=in_sub, w1=w1, w2=w2, w3t=w3t, b1=b1, b2=b2, b3t=b3t,
                rows=rows)


def pack_params(params):
    """Pack (w1,b1,w2,b2,w3,b3) -- w stored (in, out) -- into ONE zero-padded f32
    slab of shape (rows, 128).  Call ONCE per weight update, not per forward."""
    w1, b1, w2, b2, w3, b3 = params
    in_dim, n1 = w1.shape
    n_out = w3.shape[1]
    lo = _layout(in_dim)

    slab = jnp.zeros((lo["rows"], LANES), jnp.float32)
    slab = slab.at[lo["w1"]:lo["w1"] + in_dim, :n1].set(w1.astype(jnp.float32))
    slab = slab.at[lo["w2"]:lo["w2"] + n1, :n1].set(w2.astype(jnp.float32))
    # layer3 stored transposed ((out, in), PyTorch-native) for the lane-dense head.
    slab = slab.at[lo["w3t"]:lo["w3t"] + n_out, :n1].set(w3.astype(jnp.float32).T)
    slab = slab.at[lo["b1"], :n1].set(b1.reshape(-1).astype(jnp.float32))
    slab = slab.at[lo["b2"], :n1].set(b2.reshape(-1).astype(jnp.float32))
    slab = slab.at[lo["b3t"]:lo["b3t"] + n_out, 0].set(
        b3.reshape(-1).astype(jnp.float32))
    return slab, in_dim, n_out


# --------------------------------- kernel ----------------------------------------
def _mlp_kernel(x_ref, p_ref, o_ref, *, in_sub, w1_off, w2_off, w3t_off,
                b1_off, b2_off, b3t_off):
    """relu(relu(relu(x W1 + b1) W2 + b2) W3 + b3) on one (tm, in_sub) batch tile,
    written transposed as an (OUT_SUB, tm) lane-dense tile."""
    x = x_ref[...]                                              # (tm, in_sub)

    w1 = p_ref[w1_off:w1_off + in_sub, :]                       # (in_sub, 128)
    w2 = p_ref[w2_off:w2_off + H_P, :]                          # (128, 128)
    w3t = p_ref[w3t_off:w3t_off + OUT_SUB, :]                   # (8, 128)  (out, in)
    b1 = p_ref[b1_off:b1_off + 1, :]                            # (1, 128)
    b2 = p_ref[b2_off:b2_off + 1, :]                            # (1, 128)
    b3t = p_ref[b3t_off:b3t_off + OUT_SUB, :][:, 0:1]           # (8, 1)

    h = jnp.maximum(jnp.dot(x, w1, preferred_element_type=jnp.float32) + b1, 0.0)
    h = jnp.maximum(jnp.dot(h, w2, preferred_element_type=jnp.float32) + b2, 0.0)
    # Transposed head ("NT" matmul): (8,128) x (tm,128)^T -> (8, tm).
    ot = lax.dot_general(w3t, h, (((1,), (1,)), ((), ())),
                         preferred_element_type=jnp.float32)
    o_ref[...] = jnp.maximum(ot + b3t, 0.0)                     # unmasked, lane-dense


# -------------------------------- wrappers ---------------------------------------
def _choose_tm(batch, tm):
    """Round tm to a multiple of 128; cap it so the 1-D 'parallel' batch grid has
    >= 2 steps when the batch allows it (both TensorCores busy on v7x)."""
    tm = max(128, (tm // 128) * 128)
    if batch > 128:
        cap = 128 * pl.cdiv(pl.cdiv(batch, 2), 128)
        tm = min(tm, cap)
    else:
        tm = 128
    return tm


def qnetwork_forward_packed(x_flat, slab, in_dim, n_out, *, tm=512):
    """Batched forward from a pre-packed slab.  x_flat: (B, in_dim) -> (B, n_out)."""
    lo = _layout(in_dim)
    B = x_flat.shape[0]
    tm = _choose_tm(B, tm)
    b_pad = pl.cdiv(B, tm) * tm

    # Pad batch rows to a tile multiple, features only to a sublane multiple
    # (NOT to 128 lanes -> ~8x less input HBM traffic than before).
    x_p = jnp.pad(x_flat.astype(jnp.float32),
                  ((0, b_pad - B), (0, lo["in_sub"] - in_dim)))

    kernel = partial(_mlp_kernel, in_sub=lo["in_sub"], w1_off=lo["w1"],
                     w2_off=lo["w2"], w3t_off=lo["w3t"], b1_off=lo["b1"],
                     b2_off=lo["b2"], b3t_off=lo["b3t"])

    out_t = pl.pallas_call(
        kernel,
        out_shape=jax.ShapeDtypeStruct((OUT_SUB, b_pad), jnp.float32),
        grid=(b_pad // tm,),
        in_specs=[
            pl.BlockSpec((tm, lo["in_sub"]), lambda i: (i, 0)),    # batch tile
            pl.BlockSpec((lo["rows"], LANES), lambda i: (0, 0)),   # params: resident
        ],
        out_specs=pl.BlockSpec((OUT_SUB, tm), lambda i: (0, i)),   # lane-dense store
        compiler_params=pltpu.CompilerParams(
            dimension_semantics=("parallel",)),                    # megacore on v7x
    )(x_p, slab)

    return out_t[:n_out, :B].T


def qnetwork_forward_batch(x_flat, params, *, tm=512):
    """Convenience: pack + run.  Prefer make_batched_forward to pack only once."""
    slab, in_dim, n_out = pack_params(params)
    return qnetwork_forward_packed(x_flat, slab, in_dim, n_out, tm=tm)


def make_batched_forward(params, *, tm=512):
    """Pre-pack the weight slab once and return a jitted batched apply fn."""
    slab, in_dim, n_out = pack_params(params)

    @jax.jit
    def apply_fn(x_flat):
        return qnetwork_forward_packed(x_flat, slab, in_dim, n_out, tm=tm)

    return apply_fn


def qnetwork_forward(x, params, *, use_pallas=False):
    """PyTorch-semantics forward: x is one state (2, lookback) -> (1, n_out).
    Default is the fused pure-JAX path (per perf review: a pallas launch + 128-row
    tile padding is pure overhead for a single 16->32->32->2 row); set
    use_pallas=True to route through the kernel."""
    in_dim = params[0].shape[0]
    x_flat = x.reshape(1, in_dim)            # unsqueeze(0) + flatten
    if use_pallas:
        slab, in_dim, n_out = pack_params(params)
        return qnetwork_forward_packed(x_flat, slab, in_dim, n_out, tm=128)
    return reference_forward(x_flat, params)
    # TODO(synk): for per-timestep RL rollouts, batch timesteps via lax.scan and
    # feed them through make_batched_forward instead of per-step B=1 calls.


# ------------------------------ init & reference ---------------------------------
def init_params(key, lookback, n1=32, n_out=2):
    """Matches the PyTorch module: kaiming_uniform (fan_in, relu) weights,
    default Linear uniform(-1/sqrt(fan_in), 1/sqrt(fan_in)) biases.
    Stored pre-transposed as (in, out)."""
    in_dim = 2 * lookback
    dims = [(in_dim, n1), (n1, n1), (n1, n_out)]
    keys = jax.random.split(key, 2 * len(dims))
    params = []
    for i, (fan_in, fan_out) in enumerate(dims):
        gain = math.sqrt(2.0)                        # relu
        bound_w = gain * math.sqrt(3.0 / fan_in)     # kaiming_uniform bound
        w = jax.random.uniform(keys[2 * i], (fan_in, fan_out),
                               minval=-bound_w, maxval=bound_w, dtype=jnp.float32)
        bound_b = 1.0 / math.sqrt(fan_in)
        b = jax.random.uniform(keys[2 * i + 1], (1, fan_out),
                               minval=-bound_b, maxval=bound_b, dtype=jnp.float32)
        params.extend([w, b])
    return tuple(params)


def reference_forward(x_flat, params):
    """Pure-JAX reference of the PyTorch forward (batched)."""
    w1, b1, w2, b2, w3, b3 = params
    h = x_flat.astype(jnp.float32)
    h = jnp.maximum(h @ w1 + b1, 0.0)
    h = jnp.maximum(h @ w2 + b2, 0.0)
    h = jnp.maximum(h @ w3 + b3, 0.0)
    return h


if __name__ == "__main__":
    lookback = 8      # input feature dim = 2 * lookback = 16
    n1 = 32

    key = jax.random.PRNGKey(0)
    k_params, k_x, k_xb = jax.random.split(key, 3)
    params = init_params(k_params, lookback, n1=n1, n_out=2)

    # 1) Single-state path (exact PyTorch forward semantics: (2, lookback) -> (1, 2)),
    #    checked through both the Pallas kernel and the pure-JAX fast path.
    x = jax.random.normal(k_x, (2, lookback), dtype=jnp.float32)
    ref1 = reference_forward(x.reshape(1, -1), params)
    out1_pl = jax.block_until_ready(qnetwork_forward(x, params, use_pallas=True))
    out1_jx = qnetwork_forward(x, params)
    assert out1_pl.shape == (1, 2), out1_pl.shape
    assert jnp.allclose(out1_pl, ref1, atol=1e-4, rtol=1e-4), (out1_pl, ref1)
    assert jnp.allclose(out1_jx, ref1, atol=1e-4, rtol=1e-4), (out1_jx, ref1)

    # 2) Batched Pallas path: pre-packed slab, jitted, two 128-row tiles on the
    #    "parallel" batch axis (exercises megacore sharding on v7x).
    B = 256
    xb = jax.random.normal(k_xb, (B, 2 * lookback), dtype=jnp.float32)
    apply_fn = make_batched_forward(params, tm=512)   # tm auto-capped to 128 -> 2 tiles
    out2 = jax.block_until_ready(apply_fn(xb))
    ref2 = reference_forward(xb, params)
    assert out2.shape == (B, 2), out2.shape
    assert jnp.allclose(out2, ref2, atol=1e-4, rtol=1e-4)

    print("KERNEL_OK")
</pallas_src>

<mosaic_0001>
module attributes {stable_mosaic.version = 11 : i64} {
  func.func @_mlp_kernel(%arg0: i32, %arg1: memref<128x16xf32, #tpu.memory_space<vmem>>, %arg2: memref<176x128xf32, #tpu.memory_space<vmem>>, %arg3: memref<8x128xf32, #tpu.memory_space<vmem>>) attributes {dimension_semantics = [#tpu.dimension_semantics<parallel>], iteration_bounds = array<i64: 1>, scalar_prefetch = 0 : i64, scratch_operands = 0 : i64, tpu.core_type = #tpu.core_type<tc>, window_params = [{transform_indices = @transform_0, window_bounds = array<i64: 128, 16>}, {pipeline_mode = #tpu.pipeline_mode<synchronous>, transform_indices = @transform_1, window_bounds = array<i64: 176, 128>}, {transform_indices = @transform_2, window_bounds = array<i64: 8, 128>}]} {
    %c0 = arith.constant 0 : index
    %c0_0 = arith.constant 0 : index
    %0 = vector.load %arg1[%c0, %c0_0] : memref<128x16xf32, #tpu.memory_space<vmem>>, vector<128x16xf32>
    %c0_1 = arith.constant 0 : index
    %c0_2 = arith.constant 0 : index
    %1 = vector.load %arg2[%c0_1, %c0_2] : memref<176x128xf32, #tpu.memory_space<vmem>>, vector<16x128xf32>
    %c16 = arith.constant 16 : index
    %c0_3 = arith.constant 0 : index
    %2 = vector.load %arg2[%c16, %c0_3] : memref<176x128xf32, #tpu.memory_space<vmem>>, vector<128x128xf32>
    %c144 = arith.constant 144 : index
    %c0_4 = arith.constant 0 : index
    %3 = vector.load %arg2[%c144, %c0_4] : memref<176x128xf32, #tpu.memory_space<vmem>>, vector<8x128xf32>
    %c152 = arith.constant 152 : index
    %c0_5 = arith.constant 0 : index
    %4 = vector.load %arg2[%c152, %c0_5] : memref<176x128xf32, #tpu.memory_space<vmem>>, vector<1x128xf32>
    %c160 = arith.constant 160 : index
    %c0_6 = arith.constant 0 : index
    %5 = vector.load %arg2[%c160, %c0_6] : memref<176x128xf32, #tpu.memory_space<vmem>>, vector<1x128xf32>
    %c168 = arith.constant 168 : index
    %c0_7 = arith.constant 0 : index
    %6 = vector.load %arg2[%c168, %c0_7] : memref<176x128xf32, #tpu.memory_space<vmem>>, vector<8x128xf32>
    %7 = vector.extract_strided_slice %6 {offsets = [0, 0], sizes = [8, 1], strides = [1, 1]} : vector<8x128xf32> to vector<8x1xf32>
    %cst = arith.constant dense<0.000000e+00> : vector<128x128xf32>
    %8 = tpu.matmul %0, %1, %cst {dimension_numbers = #tpu.dot_dimension_numbers<[1], [0], [0], [1], [0, 0, 1, 1], [], []>} : vector<128x16xf32>, vector<16x128xf32>, vector<128x128xf32> -> vector<128x128xf32>
    %9 = vector.broadcast %4 : vector<1x128xf32> to vector<128x128xf32>
    %10 = arith.addf %8, %9 : vector<128x128xf32>
    %cst_8 = arith.constant 0.000000e+00 : f32
    %11 = vector.broadcast %cst_8 : f32 to vector<128x128xf32>
    %12 = arith.maximumf %10, %11 : vector<128x128xf32>
    %cst_9 = arith.constant dense<0.000000e+00> : vector<128x128xf32>
    %13 = tpu.matmul %12, %2, %cst_9 {dimension_numbers = #tpu.dot_dimension_numbers<[1], [0], [0], [1], [0, 0, 1, 1], [], []>} : vector<128x128xf32>, vector<128x128xf32>, vector<128x128xf32> -> vector<128x128xf32>
    %14 = vector.broadcast %5 : vector<1x128xf32> to vector<128x128xf32>
    %15 = arith.addf %13, %14 : vector<128x128xf32>
    %cst_10 = arith.constant 0.000000e+00 : f32
    %16 = vector.broadcast %cst_10 : f32 to vector<128x128xf32>
    %17 = arith.maximumf %15, %16 : vector<128x128xf32>
    %cst_11 = arith.constant dense<0.000000e+00> : vector<8x128xf32>
    %18 = tpu.matmul %3, %17, %cst_11 {dimension_numbers = #tpu.dot_dimension_numbers<[1], [1], [0], [0], [0, 0, 1, 0], [], []>} : vector<8x128xf32>, vector<128x128xf32>, vector<8x128xf32> -> vector<8x128xf32>
    %19 = vector.broadcast %7 : vector<8x1xf32> to vector<8x128xf32>
    %20 = arith.addf %18, %19 : vector<8x128xf32>
    %cst_12 = arith.constant 0.000000e+00 : f32
    %21 = vector.broadcast %cst_12 : f32 to vector<8x128xf32>
    %22 = arith.maximumf %20, %21 : vector<8x128xf32>
    %c0_13 = arith.constant 0 : index
    %c0_14 = arith.constant 0 : index
    %23 = vector.load %arg3[%c0_13, %c0_14] : memref<8x128xf32, #tpu.memory_space<vmem>>, vector<8x128xf32>
    tpu.vector_store %arg3[%c0_13, %c0_14], %22 {strides = array<i32>} : memref<8x128xf32, #tpu.memory_space<vmem>>, vector<8x128xf32>,
    return
  }
  func.func @transform_0(%arg0: i32) -> (i32, i32) {
    %c0_i32 = arith.constant 0 : i32
    %c0_i32_0 = arith.constant 0 : i32
    return %arg0, %c0_i32 : i32, i32
  }
  func.func @transform_1(%arg0: i32) -> (i32, i32) {
    %c0_i32 = arith.constant 0 : i32
    %c0_i32_0 = arith.constant 0 : i32
    %c0_i32_1 = arith.constant 0 : i32
    return %c0_i32, %c0_i32_0 : i32, i32
  }
  func.func @transform_2(%arg0: i32) -> (i32, i32) {
    %c0_i32 = arith.constant 0 : i32
    %c0_i32_0 = arith.constant 0 : i32
    return %c0_i32, %arg0 : i32, i32
  }
}

</mosaic_0001>

<llo_original>
// kernel: tpu_custom_call.1
$region0: #{tpu_custom_call.1}
  #allocation0 [shape = 'u32[]', space=smem, size = 0x4, offset = 0x4, fixed_abs, tag = 'smem constant byte address 0x4 - core index']
  #allocation1 [shape = 'u32[72,128]{1,0:T(1,128)}', space=vmem, size = 0x9000, scoped, tag = 'internal scratch']
  %s0 = inlined_call_operand.vmem [shape: f32[128,16], index: 0, kind: input, shape index: {}]
  %s1 = inlined_call_operand.hbm [shape: f32[176,128], index: 1, kind: input, shape index: {}]
  %s2 = inlined_call_operand.hbm [shape: f32[8,128], index: 2, kind: output, shape index: {}]
  %s3 = sld [smem:[#allocation0]]
  $region22: #{tpu_custom_call.1} parent=0
    _
  %s5 = ssub.s32 1, %s3
  %s6 = scalar_select 0, %s5, %s3
  $region1: #{tpu_custom_call.1} parent=0
    #allocation2 [shape = 'u8[90112]{0}', space=vmem, size = 0x16000, scoped, tag = 'input window, operand 1, single buffered']
    #allocation3 [shape = 's32[1]{0}', space=sflag, size = 0x4, scoped, tag = 'scoped memory for tpu_custom_call.1']
    #allocation4 [shape = 's32[1]{0}', space=sflag, size = 0x4, scoped, tag = 'scoped memory for tpu_custom_call.1']
    #allocation5 [shape = 'u8[4096]{0}', space=vmem, size = 0x1000, scoped, tag = 'output window, operand 0, single buffered']
    %7 = vsyncpa [#allocation3], 0
    %8 = vsyncpa [#allocation4], 0
    // Predicated region
    $region2: #{tpu_custom_call.1} parent=1 // pred_check
      _
    $region3: #{tpu_custom_call.1} parent=1 // pred_check_branch
      %10 = sbr.rel (0) target = $region5
    $region4: #{tpu_custom_call.1} parent=1 // pred_region
      _
    $region5: #{tpu_custom_call.1} parent=1 // pred_fallthru
      _
    // Predicated region
    $region6: #{tpu_custom_call.1} parent=1 // pred_check
      _
    $region7: #{tpu_custom_call.1} parent=1 // pred_check_branch
      %12 = sbr.rel (0) target = $region9
    $region8: #{tpu_custom_call.1} parent=1 // pred_region
      %14 = vsyncadd [#allocation3], 0
      %s15 = sshll.u32 %s1, 4
      %s16 = int_to_ptr.hbm [resolvable:$true] %s15
      %s17 = sshll.u32 [#allocation2], 4
      %s18 = int_to_ptr.vmem [resolvable:$true] %s17
      %23 = dma.hbm_to_vmem [thread:$0]  %s16, 2816, %s18, [#allocation3], 128, 128, 8
    $region9: #{tpu_custom_call.1} parent=1 // pred_fallthru
      _
    // Predicated region
    $region10: #{tpu_custom_call.1} parent=1 // pred_check
      _
    $region11: #{tpu_custom_call.1} parent=1 // pred_check_branch
      %25 = sbr.rel (0) target = $region13
    $region12: #{tpu_custom_call.1} parent=1 // pred_region
      %27 = dma.done [#allocation3], 2816
    $region13: #{tpu_custom_call.1} parent=1 // pred_fallthru
      _
    %v28 = vld [vmem:[%s0] sm:$0xff]
    %v29 = vld [vmem:[%s0 + $0x8] sm:$0xff]
    %v30 = vld [vmem:[%s0 + $0x10] sm:$0xff]
    %v31 = vld [vmem:[%s0 + $0x18] sm:$0xff]
    %v32 = vld [vmem:[%s0 + $0x20] sm:$0xff]
    %v33 = vld [vmem:[%s0 + $0x28] sm:$0xff]
    %v34 = vld [vmem:[%s0 + $0x30] sm:$0xff]
    %v35 = vld [vmem:[%s0 + $0x38] sm:$0xff]
    %v36 = vld [vmem:[%s0 + $0x40] sm:$0xff]
    %v37 = vld [vmem:[%s0 + $0x48] sm:$0xff]
    %v38 = vld [vmem:[%s0 + $0x50] sm:$0xff]
    %v39 = vld [vmem:[%s0 + $0x58] sm:$0xff]
    %v40 = vld [vmem:[%s0 + $0x60] sm:$0xff]
    %v41 = vld [vmem:[%s0 + $0x68] sm:$0xff]
    %v42 = vld [vmem:[%s0 + $0x70] sm:$0xff]
    %v43 = vld [vmem:[%s0 + $0x78] sm:$0xff]
    %v44 = vld [vmem:[#allocation2] sm:$0xff]
    %v45 = vld [vmem:[#allocation2 + $0x8] sm:$0xff]
    %v46 = vld [vmem:[#allocation2 + $0x10] sm:$0xff]
    %v47 = vld [vmem:[#allocation2 + $0x18] sm:$0xff]
    %v48 = vld [vmem:[#allocation2 + $0x20] sm:$0xff]
    %v49 = vld [vmem:[#allocation2 + $0x28] sm:$0xff]
    %v50 = vld [vmem:[#allocation2 + $0x30] sm:$0xff]
    %v51 = vld [vmem:[#allocation2 + $0x38] sm:$0xff]
    %v52 = vld [vmem:[#allocation2 + $0x40] sm:$0xff]
    %v53 = vld [vmem:[#allocation2 + $0x48] sm:$0xff]
    %v54 = vld [vmem:[#allocation2 + $0x50] sm:$0xff]
    %v55 = vld [vmem:[#allocation2 + $0x58] sm:$0xff]
    %v56 = vld [vmem:[#allocation2 + $0x60] sm:$0xff]
    %v57 = vld [vmem:[#allocation2 + $0x68] sm:$0xff]
    %v58 = vld [vmem:[#allocation2 + $0x70] sm:$0xff]
    %v59 = vld [vmem:[#allocation2 + $0x78] sm:$0xff]
    %v60 = vld [vmem:[#allocation2 + $0x80] sm:$0xff]
    %v61 = vld [vmem:[#allocation2 + $0x88] sm:$0xff]
    %v62 = vld [vmem:[#allocation2 + $0x90] sm:$0xff]
    %v63 = vld [vmem:[#allocation2 + $0x98] sm:$0x1]
    %v64 = vld [vmem:[#allocation2 + $0xa0] sm:$0x1]
    %v65 = vld [vmem:[#allocation2 + $0xa8] sm:$0xff]
    %v66 = vperm.slane %v63, 0
    %vm67 = vcmask 130048
    %v69 = vsel %vm67, %v28, 0
    %v72 = vsel %vm67, %v29, 0
    %v75 = vsel %vm67, %v30, 0
    %v78 = vsel %vm67, %v31, 0
    %v81 = vsel %vm67, %v32, 0
    %v84 = vsel %vm67, %v33, 0
    %v87 = vsel %vm67, %v34, 0
    %v90 = vsel %vm67, %v35, 0
    %v93 = vsel %vm67, %v36, 0
    %v96 = vsel %vm67, %v37, 0
    %v99 = vsel %vm67, %v38, 0
    %v102 = vsel %vm67, %v39, 0
    %v105 = vsel %vm67, %v40, 0
    %v108 = vsel %vm67, %v41, 0
    %v111 = vsel %vm67, %v42, 0
    %v114 = vsel %vm67, %v43, 0
    %116 = vmatpush.msra.mxu0 0.0
    %117 = vmatpush.msra.mxu0 0.0
    %118 = vmatpush.msra.mxu0 0.0
    %119 = vmatpush.msra.mxu0 0.0
    %120 = vmatpush.msra.mxu0 0.0
    %121 = vmatpush.msra.mxu0 0.0
    %122 = vmatpush.msra.mxu0 0.0
    %123 = vmatpush.msra.mxu0 0.0
    %124 = vmatpush.msra.mxu0 0.0
    %125 = vmatpush.msra.mxu0 0.0
    %126 = vmatpush.msra.mxu0 0.0
    %127 = vmatpush.msra.mxu0 0.0
    %128 = vmatpush.msra.mxu0 0.0
    %129 = vmatpush.msra.mxu0 0.0
    %130 = vmatpush.msra.mxu0 %v45
    %131 = vmatpush.msra.mxu0 %v44
    %132 = vmatmul.f32.gmra.mxu0 %v69
    %v133 = vpop.f32.mrf.mxu0
    %v134 = vadd.f32 %v66, %v133
    %135 = vmatmul.f32.gmra.mxu0 %v72
    %v136 = vpop.f32.mrf.mxu0
    %v137 = vadd.f32 %v66, %v136
    %138 = vmatmul.f32.gmra.mxu0 %v75
    %v139 = vpop.f32.mrf.mxu0
    %v140 = vadd.f32 %v66, %v139
    %141 = vmatmul.f32.gmra.mxu0 %v78
    %v142 = vpop.f32.mrf.mxu0
    %v143 = vadd.f32 %v66, %v142
    %144 = vmatmul.f32.gmra.mxu0 %v81
    %v145 = vpop.f32.mrf.mxu0
    %v146 = vadd.f32 %v66, %v145
    %147 = vmatmul.f32.gmra.mxu0 %v84
    %v148 = vpop.f32.mrf.mxu0
    %v149 = vadd.f32 %v66, %v148
    %150 = vmatmul.f32.gmra.mxu0 %v87
    %v151 = vpop.f32.mrf.mxu0
    %v152 = vadd.f32 %v66, %v151
    %153 = vmatmul.f32.gmra.mxu0 %v90
    %v154 = vpop.f32.mrf.mxu0
    %v155 = vadd.f32 %v66, %v154
    %156 = vmatmul.f32.gmra.mxu0 %v93
    %v157 = vpop.f32.mrf.mxu0
    %v158 = vadd.f32 %v66, %v157
    %159 = vmatmul.f32.gmra.mxu0 %v96
    %v160 = vpop.f32.mrf.mxu0
    %v161 = vadd.f32 %v66, %v160
    %162 = vmatmul.f32.gmra.mxu0 %v99
    %v163 = vpop.f32.mrf.mxu0
    %v164 = vadd.f32 %v66, %v163
    %165 = vmatmul.f32.gmra.mxu0 %v102
    %v166 = vpop.f32.mrf.mxu0
    %v167 = vadd.f32 %v66, %v166
    %168 = vmatmul.f32.gmra.mxu0 %v105
    %v169 = vpop.f32.mrf.mxu0
    %v170 = vadd.f32 %v66, %v169
    %171 = vmatmul.f32.gmra.mxu0 %v108
    %v172 = vpop.f32.mrf.mxu0
    %v173 = vadd.f32 %v66, %v172
    %174 = vmatmul.f32.gmra.mxu0 %v111
    %v175 = vpop.f32.mrf.mxu0
    %v176 = vadd.f32 %v66, %v175
    %177 = vmatmul.f32.gmra.mxu0 %v114
    %v178 = vpop.f32.mrf.mxu0
    %v179 = vadd.f32 %v66, %v178
    %180 = vdwg.mxu0
    %v181 = vmax.f32 %v134, 0.0
    %v182 = vmax.f32 %v137, 0.0
    %v183 = vmax.f32 %v140, 0.0
    %v184 = vmax.f32 %v143, 0.0
    %v185 = vmax.f32 %v146, 0.0
    %v186 = vmax.f32 %v149, 0.0
    %v187 = vmax.f32 %v152, 0.0
    %v188 = vmax.f32 %v155, 0.0
    %v189 = vmax.f32 %v158, 0.0
    %v190 = vmax.f32 %v161, 0.0
    %v191 = vmax.f32 %v164, 0.0
    %v192 = vmax.f32 %v167, 0.0
    %v193 = vmax.f32 %v170, 0.0
    %v194 = vmax.f32 %v173, 0.0
    %v195 = vmax.f32 %v176, 0.0
    %v196 = vmax.f32 %v179, 0.0
    %v197 = vperm.slane %v64, 0
    %198 = vmatpush.msra.mxu0 %v61
    %199 = vmatpush.msra.mxu0 %v60
    %200 = vmatpush.msra.mxu0 %v59
    %201 = vmatpush.msra.mxu0 %v58
    %202 = vmatpush.msra.mxu0 %v57
    %203 = vmatpush.msra.mxu0 %v56
    %204 = vmatpush.msra.mxu0 %v55
    %205 = vmatpush.msra.mxu0 %v54
    %206 = vmatpush.msra.mxu0 %v53
    %207 = vmatpush.msra.mxu0 %v52
    %208 = vmatpush.msra.mxu0 %v51
    %209 = vmatpush.msra.mxu0 %v50
    %210 = vmatpush.msra.mxu0 %v49
    %211 = vmatpush.msra.mxu0 %v48
    %212 = vmatpush.msra.mxu0 %v47
    %213 = vmatpush.msra.mxu0 %v46
    %214 = vmatmul.f32.gmra.mxu0 %v181
    %v215 = vpop.f32.mrf.mxu0
    %v216 = vadd.f32 %v197, %v215
    %217 = vmatmul.f32.gmra.mxu0 %v182
    %v218 = vpop.f32.mrf.mxu0
    %v219 = vadd.f32 %v197, %v218
    %220 = vmatmul.f32.gmra.mxu0 %v183
    %v221 = vpop.f32.mrf.mxu0
    %v222 = vadd.f32 %v197, %v221
    %223 = vmatmul.f32.gmra.mxu0 %v184
    %v224 = vpop.f32.mrf.mxu0
    %v225 = vadd.f32 %v197, %v224
    %226 = vmatmul.f32.gmra.mxu0 %v185
    %v227 = vpop.f32.mrf.mxu0
    %v228 = vadd.f32 %v197, %v227
    %229 = vmatmul.f32.gmra.mxu0 %v186
    %v230 = vpop.f32.mrf.mxu0
    %v231 = vadd.f32 %v197, %v230
    %232 = vmatmul.f32.gmra.mxu0 %v187
    %v233 = vpop.f32.mrf.mxu0
    %v234 = vadd.f32 %v197, %v233
    %235 = vmatmul.f32.gmra.mxu0 %v188
    %v236 = vpop.f32.mrf.mxu0
    %v237 = vadd.f32 %v197, %v236
    %238 = vmatmul.f32.gmra.mxu0 %v189
    %v239 = vpop.f32.mrf.mxu0
    %v240 = vadd.f32 %v197, %v239
    %241 = vmatmul.f32.gmra.mxu0 %v190
    %v242 = vpop.f32.mrf.mxu0
    %v243 = vadd.f32 %v197, %v242
    %244 = vmatmul.f32.gmra.mxu0 %v191
    %v245 = vpop.f32.mrf.mxu0
    %v246 = vadd.f32 %v197, %v245
    %247 = vmatmul.f32.gmra.mxu0 %v192
    %v248 = vpop.f32.mrf.mxu0
    %v249 = vadd.f32 %v197, %v248
    %250 = vmatmul.f32.gmra.mxu0 %v193
    %v251 = vpop.f32.mrf.mxu0
    %v252 = vadd.f32 %v197, %v251
    %253 = vmatmul.f32.gmra.mxu0 %v194
    %v254 = vpop.f32.mrf.mxu0
    %v255 = vadd.f32 %v197, %v254
    %256 = vmatmul.f32.gmra.mxu0 %v195
    %v257 = vpop.f32.mrf.mxu0
    %v258 = vadd.f32 %v197, %v257
    %259 = vmatmul.f32.gmra.mxu0 %v196
    %v260 = vpop.f32.mrf.mxu0
    %v261 = vadd.f32 %v197, %v260
    %262 = vdwg.mxu0
    %v263 = vmax.f32 %v216, 0.0
    %v264 = vmax.f32 %v219, 0.0
    %v265 = vmax.f32 %v222, 0.0
    %v266 = vmax.f32 %v225, 0.0
    %v267 = vmax.f32 %v228, 0.0
    %v268 = vmax.f32 %v231, 0.0
    %v269 = vmax.f32 %v234, 0.0
    %v270 = vmax.f32 %v237, 0.0
    %v271 = vmax.f32 %v240, 0.0
    %v272 = vmax.f32 %v243, 0.0
    %v273 = vmax.f32 %v246, 0.0
    %v274 = vmax.f32 %v249, 0.0
    %v275 = vmax.f32 %v252, 0.0
    %v276 = vmax.f32 %v255, 0.0
    %v277 = vmax.f32 %v258, 0.0
    %v278 = vmax.f32 %v261, 0.0
    %280 = vset.pattern.permute.xlu0 0
    %281 = vperm.xlu0 %280, %v65
    %v282 = vpop.permute.xlu0 %281
    %284 = vmatpush.xpose.msra.mxu0 %v278
    %285 = vmatpush.xpose.msra.mxu0 %v277
    %286 = vmatpush.xpose.msra.mxu0 %v276
    %287 = vmatpush.xpose.msra.mxu0 %v275
    %288 = vmatpush.xpose.msra.mxu0 %v274
    %289 = vmatpush.xpose.msra.mxu0 %v273
    %290 = vmatpush.xpose.msra.mxu0 %v272
    %291 = vmatpush.xpose.msra.mxu0 %v271
    %292 = vmatpush.xpose.msra.mxu0 %v270
    %293 = vmatpush.xpose.msra.mxu0 %v269
    %294 = vmatpush.xpose.msra.mxu0 %v268
    %295 = vmatpush.xpose.msra.mxu0 %v267
    %296 = vmatpush.xpose.msra.mxu0 %v266
    %297 = vmatpush.xpose.msra.mxu0 %v265
    %298 = vmatpush.xpose.msra.mxu0 %v264
    %299 = vmatpush.xpose.msra.mxu0 %v263
    %300 = vmatmul.f32.gmra.mxu0 %v62
    %v301 = vpop.f32.mrf.mxu0
    %v302 = vadd.f32 %v282, %v301
    %303 = vdwg.mxu0
    %v304 = vmax.f32 %v302, 0.0
    %305 = vst [vmem:[#allocation5] sm:$0xff] %v304
    // Predicated region
    $region14: #{tpu_custom_call.1} parent=1 // pred_check
      _
    $region15: #{tpu_custom_call.1} parent=1 // pred_check_branch
      %307 = sbr.rel (0) target = $region17
    $region16: #{tpu_custom_call.1} parent=1 // pred_region
      %309 = vsyncadd [#allocation4], 0
      %s311 = sshll.u32 [#allocation5], 4
      %s312 = int_to_ptr.vmem [resolvable:$true] %s311
      %s313 = sshll.u32 %s2, 4
      %s314 = int_to_ptr.hbm [resolvable:$true] %s313
      %316 = dma.vmem_to_hbm [thread:$0]  %s312, 128, %s314, [#allocation4]
    $region17: #{tpu_custom_call.1} parent=1 // pred_fallthru
      _
    // Predicated region
    $region18: #{tpu_custom_call.1} parent=1 // pred_check
      _
    $region19: #{tpu_custom_call.1} parent=1 // pred_check_branch
      %318 = sbr.rel (0) target = $region21
    $region20: #{tpu_custom_call.1} parent=1 // pred_region
      %320 = dma.done [#allocation4], 128
    $region21: #{tpu_custom_call.1} parent=1 // pred_fallthru
      _
    %321 = vsyncpa [#allocation3], 1
    %322 = vsyncpa [#allocation4], 1

</llo_original>
